<compile_context>
chip_gen: v6e
topology: v6e:2x2x1
jax: 0.10.0
libtpu: 0.0.40
codegen_flags: <defaults>
</compile_context>

<pallas_src>
from functools import partial

import jax
import jax.numpy as jnp
from jax.experimental import pallas as pl
from jax.experimental.pallas import tpu as pltpu

BN_EPS = 0.001
LEAKY_SLOPE = 0.01


def _leaky_relu(x):
    # max(x, a*x) == LeakyReLU_a(x) for 0 < a < 1: single vmax per tile.
    return jnp.maximum(x, LEAKY_SLOPE * x)


def _bn_train_fold(h, gamma, beta, inv_b):
    """Training-mode BatchNorm1d folded to one per-feature scale/shift.

    Single pass over the (B, H) tile: biased var = E[h^2] - mean^2, i.e. only
    the sum and sum-of-squares column reductions (no centered second pass).
    eps = 1e-3 in f32 keeps the cancellation harmless, and the sum/sum-sq form
    accumulates across batch tiles should a two-pass gridded variant be added.
    """
    s1 = jnp.sum(h, axis=0, keepdims=True)          # (1, H)
    s2 = jnp.sum(h * h, axis=0, keepdims=True)      # (1, H)
    mean = s1 * inv_b
    var = s2 * inv_b - mean * mean                  # biased variance
    scale = gamma * jax.lax.rsqrt(var + BN_EPS)     # (1, H)
    shift = beta - mean * scale                     # (1, H)
    return h * scale + shift


def residual_net_kernel(
    x_ref,        # (B, in_features)          one independent batch group
    w0_ref,       # (in_features, H)          f32
    blk_w_ref,    # (2*NB, H, H)              f32 (or bf16 when use_bf16)
    wf_ref,       # (H, H)  final weight, zero cols >= out_features
    vec_ref,      # (3 + 4*NB, H) f32: [g0, be0, blk_g(2NB), blk_be(2NB), bf_pad]
    out_ref,      # (B, H)  lane-dense padded output; wrapper slices :out_f
    *, num_blocks, inv_b,
):
    nb2 = 2 * num_blocks

    # ---- initial layer: Linear (bias dropped; exactly cancelled by the
    #      batch-mean subtraction of training-mode BN) -> BN -> LeakyReLU
    h = jnp.dot(x_ref[...], w0_ref[...], preferred_element_type=jnp.float32)
    h = _leaky_relu(_bn_train_fold(h, vec_ref[0:1, :], vec_ref[1:2, :], inv_b))

    # ---- residual blocks (depth is tiny; static Python loop) ----
    blk_dtype = blk_w_ref.dtype
    for i in range(num_blocks):
        res = h
        t = h
        for j in range(2):
            k = 2 * i + j               # static index into stacked params
            t = jnp.dot(t.astype(blk_dtype), blk_w_ref[k],
                        preferred_element_type=jnp.float32)
            gamma = vec_ref[2 + k: 3 + k, :]
            beta = vec_ref[2 + nb2 + k: 3 + nb2 + k, :]
            t = _leaky_relu(_bn_train_fold(t, gamma, beta, inv_b))
        h = res + t

    # ---- final layer: Linear kept lane-dense at width H (padded weight and
    #      padded bias row): no 2-lane parameter slice, no narrow masked
    #      store.  The wrapper slices [:, :out_features].
    bf = vec_ref[2 + 2 * nb2: 3 + 2 * nb2, :]
    out_ref[...] = (
        jnp.dot(h.astype(wf_ref.dtype), wf_ref[...],
                preferred_element_type=jnp.float32) + bf
    )


# ------------------------- operand packing -------------------------

def pack_params(params, hidden_features, out_features, num_blocks, *,
                use_bf16=False):
    """Pack kernel operands (5 inputs total).

    * Linear biases feeding training-mode BatchNorm are dropped (the batch
      mean subtraction cancels them exactly).  Re-add them if eval-mode
      running stats are ever used.
    * All (1, H) parameters are merged into one (rows, H) operand.
    * The final Linear is zero-padded to H output lanes (lane-dense store).
    * use_bf16: the (H, H) block / final weights are cast to bfloat16 for the
      MXU (full-rate on v6e/v7x); BN math and accumulation stay f32.
    """
    w0, b0, g0, be0, blk_w, blk_b, blk_g, blk_be, wf, bf = params
    del b0, blk_b  # cancelled exactly by training-mode BatchNorm

    nb2 = 2 * num_blocks
    H = hidden_features

    wf_pad = jnp.zeros((H, H), jnp.float32).at[:, :out_features].set(wf)
    bf_pad = jnp.zeros((1, H), jnp.float32).at[:, :out_features].set(bf)

    vec = jnp.concatenate(
        [g0,                                   # row 0
         be0,                                  # row 1
         blk_g.reshape(nb2, H),                # rows 2 .. 1 + nb2
         blk_be.reshape(nb2, H),               # rows 2 + nb2 .. 1 + 2*nb2
         bf_pad],                              # row 2 + 2*nb2
        axis=0,
    )

    mm_dtype = jnp.bfloat16 if use_bf16 else jnp.float32
    return w0, blk_w.astype(mm_dtype), wf_pad.astype(mm_dtype), vec


# ------------------------- pallas_call wrappers -------------------------

def residual_net_forward_batched(x, params, num_blocks, *, use_bf16=False):
    """Run the net on G independent batch groups in ONE pallas_call.

    x: (G, B, in_features) f32.  Each group is one full module forward
    (training-mode BN statistics over that group's B rows) mapped to one grid
    step, amortizing the multi-microsecond dispatch over G invocations.
    Returns (G, B, out_features) f32.
    """
    G, B, in_features = x.shape
    H = params[0].shape[-1]
    out_features = params[-1].shape[-1]
    nb2 = 2 * num_blocks
    w0, blk_w, wf_pad, vec = pack_params(params, H, out_features, num_blocks,
                                         use_bf16=use_bf16)

    kernel = partial(residual_net_kernel, num_blocks=num_blocks, inv_b=1.0 / B)

    # VMEM per grid step: x/out tiles + <20 KiB of weights -- far below every
    # generation's scoped limit (16/32/32 MiB on v5e/v6e/v7x), so no
    # vmem_limit_bytes override is needed.  For throughput use-cases size B at
    # ~512-1024 rows per group (64-128 KiB per activation buffer) to amortize
    # the ~0.35 us/step overhead while staying well inside v7x's 64 MiB VMEM.
    out = pl.pallas_call(
        kernel,
        out_shape=jax.ShapeDtypeStruct((G, B, H), jnp.float32),
        grid=(G,),
        in_specs=[
            # Per-group activations: one (B, in) block per grid step.
            pl.BlockSpec((None, B, in_features), lambda g: (g, 0, 0)),
            # Weights / packed params: constant block index -> DMA'd once,
            # kept resident in VMEM across all grid steps.
            pl.BlockSpec((in_features, H), lambda g: (0, 0)),
            pl.BlockSpec((nb2, H, H), lambda g: (0, 0, 0)),
            pl.BlockSpec((H, H), lambda g: (0, 0)),
            pl.BlockSpec((3 + 2 * nb2, H), lambda g: (0, 0)),
        ],
        out_specs=pl.BlockSpec((None, B, H), lambda g: (g, 0, 0)),
        compiler_params=pltpu.CompilerParams(
            # Groups are fully independent -> shard the grid across v7x's two
            # TensorCores; no-op on v5e/v6e (single TC).
            dimension_semantics=("parallel",),
        ),
    )(x, w0, blk_w, wf_pad, vec)

    # Lane-dense (B, H) tiles in HBM; slice to the true output width here.
    # For a huge-B, memory-bound variant prefer a narrow (B, out) out-block
    # instead, to avoid the H/out_features x extra writeback bytes.
    return out[..., :out_features]


def residual_net_forward(x, params, num_blocks, *, use_bf16=False):
    """Single-batch convenience wrapper: x (B, in_features) -> (B, out)."""
    return residual_net_forward_batched(x[None], params, num_blocks,
                                        use_bf16=use_bf16)[0]


# ------------------------- parameter construction -------------------------

def init_params(key, in_features, out_features, hidden_features, depth):
    """Deterministic synthetic init (PyTorch-Linear-style uniform bounds)."""
    num_blocks = depth // 2

    def linear(key, fan_in, fan_out):
        kw, kb = jax.random.split(key)
        bound = 1.0 / jnp.sqrt(fan_in)
        w = jax.random.uniform(kw, (fan_in, fan_out), jnp.float32, -bound, bound)
        b = jax.random.uniform(kb, (1, fan_out), jnp.float32, -bound, bound)
        return w, b

    keys = jax.random.split(key, 2 + 2 * num_blocks)

    # initial layer
    w0, b0 = linear(keys[0], in_features, hidden_features)
    g0 = jnp.ones((1, hidden_features), jnp.float32)
    be0 = jnp.zeros((1, hidden_features), jnp.float32)

    # residual blocks (2 linear+BN layers each), stacked
    blk_w, blk_b = [], []
    for k in range(2 * num_blocks):
        w, b = linear(keys[1 + k], hidden_features, hidden_features)
        blk_w.append(w)
        blk_b.append(b)
    blk_w = jnp.stack(blk_w)                                   # (2*NB, H, H)
    blk_b = jnp.stack(blk_b)                                   # (2*NB, 1, H)
    blk_g = jnp.ones((2 * num_blocks, 1, hidden_features), jnp.float32)
    blk_be = jnp.zeros((2 * num_blocks, 1, hidden_features), jnp.float32)

    # final layer
    wf, bf = linear(keys[-1], hidden_features, out_features)

    params = (w0, b0, g0, be0, blk_w, blk_b, blk_g, blk_be, wf, bf)
    return params, num_blocks


# ------------------------- pure-JAX reference (full module semantics) ------

def _bn_train_ref(x, gamma, beta):
    mean = jnp.mean(x, axis=0, keepdims=True)
    var = jnp.mean((x - mean) ** 2, axis=0, keepdims=True)
    return (x - mean) * jax.lax.rsqrt(var + BN_EPS) * gamma + beta


def residual_net_ref(x, params, num_blocks):
    w0, b0, g0, be0, blk_w, blk_b, blk_g, blk_be, wf, bf = params
    h = jnp.where(x @ w0 + b0 > 0, x @ w0 + b0, LEAKY_SLOPE * (x @ w0 + b0))
    h = _bn_train_ref(x @ w0 + b0, g0, be0)
    h = jnp.where(h > 0, h, LEAKY_SLOPE * h)
    for i in range(num_blocks):
        res = h
        t = h
        for j in range(2):
            k = 2 * i + j
            t = _bn_train_ref(t @ blk_w[k] + blk_b[k], blk_g[k], blk_be[k])
            t = jnp.where(t > 0, t, LEAKY_SLOPE * t)
        h = res + t
    return h @ wf + bf


if __name__ == "__main__":
    # Small shapes consistent with the module defaults; G independent batch
    # groups evaluated in one pallas_call (grid=(G,)).
    G, B = 4, 8
    in_features, out_features, hidden_features, depth = 4, 2, 32, 4

    key = jax.random.PRNGKey(0)
    kx, kp = jax.random.split(key)
    x = jax.random.normal(kx, (G, B, in_features), jnp.float32)
    params, num_blocks = init_params(kp, in_features, out_features,
                                     hidden_features, depth)

    out = jax.block_until_ready(
        residual_net_forward_batched(x, params, num_blocks))

    # Reference: the module forward applied to each group independently
    # (biases included, centered BN variance -> validates bias cancellation
    # and the single-pass variance rewrite).
    ref = jnp.stack([residual_net_ref(x[g], params, num_blocks)
                     for g in range(G)])
    assert out.shape == (G, B, out_features)
    assert jnp.allclose(out, ref, atol=1e-4, rtol=1e-4), "kernel/ref mismatch"

    # Single-batch wrapper (grid of 1) matches as well.
    out1 = jax.block_until_ready(residual_net_forward(x[0], params, num_blocks))
    assert jnp.allclose(out1, ref[0], atol=1e-4, rtol=1e-4), "single-batch mismatch"

    # bf16 (H, H) MXU weights (v6e/v7x path, intended for large B): loose check.
    out_bf16 = jax.block_until_ready(
        residual_net_forward_batched(x, params, num_blocks, use_bf16=True))
    assert out_bf16.shape == (G, B, out_features)
    assert float(jnp.max(jnp.abs(out_bf16 - ref))) < 0.2, "bf16 path mismatch"

    print("KERNEL_OK")
</pallas_src>

<mosaic_0001>
module attributes {stable_mosaic.version = 11 : i64} {
  func.func @residual_net_kernel(%arg0: i32, %arg1: memref<1x8x4xf32, #tpu.memory_space<vmem>>, %arg2: memref<4x32xf32, #tpu.memory_space<vmem>>, %arg3: memref<4x32x32xf32, #tpu.memory_space<vmem>>, %arg4: memref<32x32xf32, #tpu.memory_space<vmem>>, %arg5: memref<11x32xf32, #tpu.memory_space<vmem>>, %arg6: memref<1x8x32xf32, #tpu.memory_space<vmem>>) attributes {dimension_semantics = [#tpu.dimension_semantics<parallel>], iteration_bounds = array<i64: 4>, scalar_prefetch = 0 : i64, scratch_operands = 0 : i64, tpu.core_type = #tpu.core_type<tc>, window_params = [{transform_indices = @transform_0, window_bounds = array<i64: 1, 8, 4>}, {pipeline_mode = #tpu.pipeline_mode<synchronous>, transform_indices = @transform_1, window_bounds = array<i64: 4, 32>}, {pipeline_mode = #tpu.pipeline_mode<synchronous>, transform_indices = @transform_2, window_bounds = array<i64: 4, 32, 32>}, {pipeline_mode = #tpu.pipeline_mode<synchronous>, transform_indices = @transform_3, window_bounds = array<i64: 32, 32>}, {pipeline_mode = #tpu.pipeline_mode<synchronous>, transform_indices = @transform_4, window_bounds = array<i64: 11, 32>}, {transform_indices = @transform_5, window_bounds = array<i64: 1, 8, 32>}]} {
    %c0 = arith.constant 0 : index
    %c0_0 = arith.constant 0 : index
    %c0_1 = arith.constant 0 : index
    %0 = vector.load %arg1[%c0, %c0_0, %c0_1] : memref<1x8x4xf32, #tpu.memory_space<vmem>>, vector<1x8x4xf32>
    %1 = vector.shape_cast %0 : vector<1x8x4xf32> to vector<8x4xf32>
    %c0_2 = arith.constant 0 : index
    %c0_3 = arith.constant 0 : index
    %2 = vector.load %arg2[%c0_2, %c0_3] : memref<4x32xf32, #tpu.memory_space<vmem>>, vector<4x32xf32>
    %cst = arith.constant dense<0.000000e+00> : vector<8x32xf32>
    %3 = tpu.matmul %1, %2, %cst {dimension_numbers = #tpu.dot_dimension_numbers<[1], [0], [0], [1], [0, 0, 1, 1], [], []>} : vector<8x4xf32>, vector<4x32xf32>, vector<8x32xf32> -> vector<8x32xf32>
    %c0_4 = arith.constant 0 : index
    %c0_5 = arith.constant 0 : index
    %4 = vector.load %arg5[%c0_4, %c0_5] : memref<11x32xf32, #tpu.memory_space<vmem>>, vector<1x32xf32>
    %c1 = arith.constant 1 : index
    %c0_6 = arith.constant 0 : index
    %5 = vector.load %arg5[%c1, %c0_6] : memref<11x32xf32, #tpu.memory_space<vmem>>, vector<1x32xf32>
    %cst_7 = arith.constant dense<0.000000e+00> : vector<32xf32>
    %6 = vector.multi_reduction <add>, %3, %cst_7 [0] : vector<8x32xf32> to vector<32xf32>
    %7 = vector.shape_cast %6 : vector<32xf32> to vector<1x32xf32>
    %8 = arith.mulf %3, %3 : vector<8x32xf32>
    %cst_8 = arith.constant dense<0.000000e+00> : vector<32xf32>
    %9 = vector.multi_reduction <add>, %8, %cst_8 [0] : vector<8x32xf32> to vector<32xf32>
    %10 = vector.shape_cast %9 : vector<32xf32> to vector<1x32xf32>
    %cst_9 = arith.constant 1.250000e-01 : f32
    %11 = vector.broadcast %cst_9 : f32 to vector<1x32xf32>
    %12 = arith.mulf %7, %11 : vector<1x32xf32>
    %cst_10 = arith.constant 1.250000e-01 : f32
    %13 = vector.broadcast %cst_10 : f32 to vector<1x32xf32>
    %14 = arith.mulf %10, %13 : vector<1x32xf32>
    %15 = arith.mulf %12, %12 : vector<1x32xf32>
    %16 = arith.subf %14, %15 : vector<1x32xf32>
    %cst_11 = arith.constant 1.000000e-03 : f32
    %17 = vector.broadcast %cst_11 : f32 to vector<1x32xf32>
    %18 = arith.addf %16, %17 : vector<1x32xf32>
    %19 = math.rsqrt %18 : vector<1x32xf32>
    %20 = arith.mulf %4, %19 : vector<1x32xf32>
    %21 = arith.mulf %12, %20 : vector<1x32xf32>
    %22 = arith.subf %5, %21 : vector<1x32xf32>
    %23 = vector.broadcast %20 : vector<1x32xf32> to vector<8x32xf32>
    %24 = arith.mulf %3, %23 : vector<8x32xf32>
    %25 = vector.broadcast %22 : vector<1x32xf32> to vector<8x32xf32>
    %26 = arith.addf %24, %25 : vector<8x32xf32>
    %cst_12 = arith.constant 0.00999999977 : f32
    %27 = vector.broadcast %cst_12 : f32 to vector<8x32xf32>
    %28 = arith.mulf %27, %26 : vector<8x32xf32>
    %29 = arith.maximumf %26, %28 : vector<8x32xf32>
    %c0_13 = arith.constant 0 : index
    %c0_14 = arith.constant 0 : index
    %c0_15 = arith.constant 0 : index
    %30 = vector.load %arg3[%c0_13, %c0_14, %c0_15] : memref<4x32x32xf32, #tpu.memory_space<vmem>>, vector<1x32x32xf32>
    %31 = vector.shape_cast %30 : vector<1x32x32xf32> to vector<32x32xf32>
    %cst_16 = arith.constant dense<0.000000e+00> : vector<8x32xf32>
    %32 = tpu.matmul %29, %31, %cst_16 {dimension_numbers = #tpu.dot_dimension_numbers<[1], [0], [0], [1], [0, 0, 1, 1], [], []>} : vector<8x32xf32>, vector<32x32xf32>, vector<8x32xf32> -> vector<8x32xf32>
    %c2 = arith.constant 2 : index
    %c0_17 = arith.constant 0 : index
    %33 = vector.load %arg5[%c2, %c0_17] : memref<11x32xf32, #tpu.memory_space<vmem>>, vector<1x32xf32>
    %c6 = arith.constant 6 : index
    %c0_18 = arith.constant 0 : index
    %34 = vector.load %arg5[%c6, %c0_18] : memref<11x32xf32, #tpu.memory_space<vmem>>, vector<1x32xf32>
    %cst_19 = arith.constant dense<0.000000e+00> : vector<32xf32>
    %35 = vector.multi_reduction <add>, %32, %cst_19 [0] : vector<8x32xf32> to vector<32xf32>
    %36 = vector.shape_cast %35 : vector<32xf32> to vector<1x32xf32>
    %37 = arith.mulf %32, %32 : vector<8x32xf32>
    %cst_20 = arith.constant dense<0.000000e+00> : vector<32xf32>
    %38 = vector.multi_reduction <add>, %37, %cst_20 [0] : vector<8x32xf32> to vector<32xf32>
    %39 = vector.shape_cast %38 : vector<32xf32> to vector<1x32xf32>
    %cst_21 = arith.constant 1.250000e-01 : f32
    %40 = vector.broadcast %cst_21 : f32 to vector<1x32xf32>
    %41 = arith.mulf %36, %40 : vector<1x32xf32>
    %cst_22 = arith.constant 1.250000e-01 : f32
    %42 = vector.broadcast %cst_22 : f32 to vector<1x32xf32>
    %43 = arith.mulf %39, %42 : vector<1x32xf32>
    %44 = arith.mulf %41, %41 : vector<1x32xf32>
    %45 = arith.subf %43, %44 : vector<1x32xf32>
    %cst_23 = arith.constant 1.000000e-03 : f32
    %46 = vector.broadcast %cst_23 : f32 to vector<1x32xf32>
    %47 = arith.addf %45, %46 : vector<1x32xf32>
    %48 = math.rsqrt %47 : vector<1x32xf32>
    %49 = arith.mulf %33, %48 : vector<1x32xf32>
    %50 = arith.mulf %41, %49 : vector<1x32xf32>
    %51 = arith.subf %34, %50 : vector<1x32xf32>
    %52 = vector.broadcast %49 : vector<1x32xf32> to vector<8x32xf32>
    %53 = arith.mulf %32, %52 : vector<8x32xf32>
    %54 = vector.broadcast %51 : vector<1x32xf32> to vector<8x32xf32>
    %55 = arith.addf %53, %54 : vector<8x32xf32>
    %cst_24 = arith.constant 0.00999999977 : f32
    %56 = vector.broadcast %cst_24 : f32 to vector<8x32xf32>
    %57 = arith.mulf %56, %55 : vector<8x32xf32>
    %58 = arith.maximumf %55, %57 : vector<8x32xf32>
    %c1_25 = arith.constant 1 : index
    %c0_26 = arith.constant 0 : index
    %c0_27 = arith.constant 0 : index
    %59 = vector.load %arg3[%c1_25, %c0_26, %c0_27] : memref<4x32x32xf32, #tpu.memory_space<vmem>>, vector<1x32x32xf32>
    %60 = vector.shape_cast %59 : vector<1x32x32xf32> to vector<32x32xf32>
    %cst_28 = arith.constant dense<0.000000e+00> : vector<8x32xf32>
    %61 = tpu.matmul %58, %60, %cst_28 {dimension_numbers = #tpu.dot_dimension_numbers<[1], [0], [0], [1], [0, 0, 1, 1], [], []>} : vector<8x32xf32>, vector<32x32xf32>, vector<8x32xf32> -> vector<8x32xf32>
    %c3 = arith.constant 3 : index
    %c0_29 = arith.constant 0 : index
    %62 = vector.load %arg5[%c3, %c0_29] : memref<11x32xf32, #tpu.memory_space<vmem>>, vector<1x32xf32>
    %c7 = arith.constant 7 : index
    %c0_30 = arith.constant 0 : index
    %63 = vector.load %arg5[%c7, %c0_30] : memref<11x32xf32, #tpu.memory_space<vmem>>, vector<1x32xf32>
    %cst_31 = arith.constant dense<0.000000e+00> : vector<32xf32>
    %64 = vector.multi_reduction <add>, %61, %cst_31 [0] : vector<8x32xf32> to vector<32xf32>
    %65 = vector.shape_cast %64 : vector<32xf32> to vector<1x32xf32>
    %66 = arith.mulf %61, %61 : vector<8x32xf32>
    %cst_32 = arith.constant dense<0.000000e+00> : vector<32xf32>
    %67 = vector.multi_reduction <add>, %66, %cst_32 [0] : vector<8x32xf32> to vector<32xf32>
    %68 = vector.shape_cast %67 : vector<32xf32> to vector<1x32xf32>
    %cst_33 = arith.constant 1.250000e-01 : f32
    %69 = vector.broadcast %cst_33 : f32 to vector<1x32xf32>
    %70 = arith.mulf %65, %69 : vector<1x32xf32>
    %cst_34 = arith.constant 1.250000e-01 : f32
    %71 = vector.broadcast %cst_34 : f32 to vector<1x32xf32>
    %72 = arith.mulf %68, %71 : vector<1x32xf32>
    %73 = arith.mulf %70, %70 : vector<1x32xf32>
    %74 = arith.subf %72, %73 : vector<1x32xf32>
    %cst_35 = arith.constant 1.000000e-03 : f32
    %75 = vector.broadcast %cst_35 : f32 to vector<1x32xf32>
    %76 = arith.addf %74, %75 : vector<1x32xf32>
    %77 = math.rsqrt %76 : vector<1x32xf32>
    %78 = arith.mulf %62, %77 : vector<1x32xf32>
    %79 = arith.mulf %70, %78 : vector<1x32xf32>
    %80 = arith.subf %63, %79 : vector<1x32xf32>
    %81 = vector.broadcast %78 : vector<1x32xf32> to vector<8x32xf32>
    %82 = arith.mulf %61, %81 : vector<8x32xf32>
    %83 = vector.broadcast %80 : vector<1x32xf32> to vector<8x32xf32>
    %84 = arith.addf %82, %83 : vector<8x32xf32>
    %cst_36 = arith.constant 0.00999999977 : f32
    %85 = vector.broadcast %cst_36 : f32 to vector<8x32xf32>
    %86 = arith.mulf %85, %84 : vector<8x32xf32>
    %87 = arith.maximumf %84, %86 : vector<8x32xf32>
    %88 = arith.addf %29, %87 : vector<8x32xf32>
    %c2_37 = arith.constant 2 : index
    %c0_38 = arith.constant 0 : index
    %c0_39 = arith.constant 0 : index
    %89 = vector.load %arg3[%c2_37, %c0_38, %c0_39] : memref<4x32x32xf32, #tpu.memory_space<vmem>>, vector<1x32x32xf32>
    %90 = vector.shape_cast %89 : vector<1x32x32xf32> to vector<32x32xf32>
    %cst_40 = arith.constant dense<0.000000e+00> : vector<8x32xf32>
    %91 = tpu.matmul %88, %90, %cst_40 {dimension_numbers = #tpu.dot_dimension_numbers<[1], [0], [0], [1], [0, 0, 1, 1], [], []>} : vector<8x32xf32>, vector<32x32xf32>, vector<8x32xf32> -> vector<8x32xf32>
    %c4 = arith.constant 4 : index
    %c0_41 = arith.constant 0 : index
    %92 = vector.load %arg5[%c4, %c0_41] : memref<11x32xf32, #tpu.memory_space<vmem>>, vector<1x32xf32>
    %c8 = arith.constant 8 : index
    %c0_42 = arith.constant 0 : index
    %93 = vector.load %arg5[%c8, %c0_42] : memref<11x32xf32, #tpu.memory_space<vmem>>, vector<1x32xf32>
    %cst_43 = arith.constant dense<0.000000e+00> : vector<32xf32>
    %94 = vector.multi_reduction <add>, %91, %cst_43 [0] : vector<8x32xf32> to vector<32xf32>
    %95 = vector.shape_cast %94 : vector<32xf32> to vector<1x32xf32>
    %96 = arith.mulf %91, %91 : vector<8x32xf32>
    %cst_44 = arith.constant dense<0.000000e+00> : vector<32xf32>
    %97 = vector.multi_reduction <add>, %96, %cst_44 [0] : vector<8x32xf32> to vector<32xf32>
    %98 = vector.shape_cast %97 : vector<32xf32> to vector<1x32xf32>
    %cst_45 = arith.constant 1.250000e-01 : f32
    %99 = vector.broadcast %cst_45 : f32 to vector<1x32xf32>
    %100 = arith.mulf %95, %99 : vector<1x32xf32>
    %cst_46 = arith.constant 1.250000e-01 : f32
    %101 = vector.broadcast %cst_46 : f32 to vector<1x32xf32>
    %102 = arith.mulf %98, %101 : vector<1x32xf32>
    %103 = arith.mulf %100, %100 : vector<1x32xf32>
    %104 = arith.subf %102, %103 : vector<1x32xf32>
    %cst_47 = arith.constant 1.000000e-03 : f32
    %105 = vector.broadcast %cst_47 : f32 to vector<1x32xf32>
    %106 = arith.addf %104, %105 : vector<1x32xf32>
    %107 = math.rsqrt %106 : vector<1x32xf32>
    %108 = arith.mulf %92, %107 : vector<1x32xf32>
    %109 = arith.mulf %100, %108 : vector<1x32xf32>
    %110 = arith.subf %93, %109 : vector<1x32xf32>
    %111 = vector.broadcast %108 : vector<1x32xf32> to vector<8x32xf32>
    %112 = arith.mulf %91, %111 : vector<8x32xf32>
    %113 = vector.broadcast %110 : vector<1x32xf32> to vector<8x32xf32>
    %114 = arith.addf %112, %113 : vector<8x32xf32>
    %cst_48 = arith.constant 0.00999999977 : f32
    %115 = vector.broadcast %cst_48 : f32 to vector<8x32xf32>
    %116 = arith.mulf %115, %114 : vector<8x32xf32>
    %117 = arith.maximumf %114, %116 : vector<8x32xf32>
    %c3_49 = arith.constant 3 : index
    %c0_50 = arith.constant 0 : index
    %c0_51 = arith.constant 0 : index
    %118 = vector.load %arg3[%c3_49, %c0_50, %c0_51] : memref<4x32x32xf32, #tpu.memory_space<vmem>>, vector<1x32x32xf32>
    %119 = vector.shape_cast %118 : vector<1x32x32xf32> to vector<32x32xf32>
    %cst_52 = arith.constant dense<0.000000e+00> : vector<8x32xf32>
    %120 = tpu.matmul %117, %119, %cst_52 {dimension_numbers = #tpu.dot_dimension_numbers<[1], [0], [0], [1], [0, 0, 1, 1], [], []>} : vector<8x32xf32>, vector<32x32xf32>, vector<8x32xf32> -> vector<8x32xf32>
    %c5 = arith.constant 5 : index
    %c0_53 = arith.constant 0 : index
    %121 = vector.load %arg5[%c5, %c0_53] : memref<11x32xf32, #tpu.memory_space<vmem>>, vector<1x32xf32>
    %c9 = arith.constant 9 : index
    %c0_54 = arith.constant 0 : index
    %122 = vector.load %arg5[%c9, %c0_54] : memref<11x32xf32, #tpu.memory_space<vmem>>, vector<1x32xf32>
    %cst_55 = arith.constant dense<0.000000e+00> : vector<32xf32>
    %123 = vector.multi_reduction <add>, %120, %cst_55 [0] : vector<8x32xf32> to vector<32xf32>
    %124 = vector.shape_cast %123 : vector<32xf32> to vector<1x32xf32>
    %125 = arith.mulf %120, %120 : vector<8x32xf32>
    %cst_56 = arith.constant dense<0.000000e+00> : vector<32xf32>
    %126 = vector.multi_reduction <add>, %125, %cst_56 [0] : vector<8x32xf32> to vector<32xf32>
    %127 = vector.shape_cast %126 : vector<32xf32> to vector<1x32xf32>
    %cst_57 = arith.constant 1.250000e-01 : f32
    %128 = vector.broadcast %cst_57 : f32 to vector<1x32xf32>
    %129 = arith.mulf %124, %128 : vector<1x32xf32>
    %cst_58 = arith.constant 1.250000e-01 : f32
    %130 = vector.broadcast %cst_58 : f32 to vector<1x32xf32>
    %131 = arith.mulf %127, %130 : vector<1x32xf32>
    %132 = arith.mulf %129, %129 : vector<1x32xf32>
    %133 = arith.subf %131, %132 : vector<1x32xf32>
    %cst_59 = arith.constant 1.000000e-03 : f32
    %134 = vector.broadcast %cst_59 : f32 to vector<1x32xf32>
    %135 = arith.addf %133, %134 : vector<1x32xf32>
    %136 = math.rsqrt %135 : vector<1x32xf32>
    %137 = arith.mulf %121, %136 : vector<1x32xf32>
    %138 = arith.mulf %129, %137 : vector<1x32xf32>
    %139 = arith.subf %122, %138 : vector<1x32xf32>
    %140 = vector.broadcast %137 : vector<1x32xf32> to vector<8x32xf32>
    %141 = arith.mulf %120, %140 : vector<8x32xf32>
    %142 = vector.broadcast %139 : vector<1x32xf32> to vector<8x32xf32>
    %143 = arith.addf %141, %142 : vector<8x32xf32>
    %cst_60 = arith.constant 0.00999999977 : f32
    %144 = vector.broadcast %cst_60 : f32 to vector<8x32xf32>
    %145 = arith.mulf %144, %143 : vector<8x32xf32>
    %146 = arith.maximumf %143, %145 : vector<8x32xf32>
    %147 = arith.addf %88, %146 : vector<8x32xf32>
    %c10 = arith.constant 10 : index
    %c0_61 = arith.constant 0 : index
    %148 = vector.load %arg5[%c10, %c0_61] : memref<11x32xf32, #tpu.memory_space<vmem>>, vector<1x32xf32>
    %c0_62 = arith.constant 0 : index
    %c0_63 = arith.constant 0 : index
    %149 = vector.load %arg4[%c0_62, %c0_63] : memref<32x32xf32, #tpu.memory_space<vmem>>, vector<32x32xf32>
    %cst_64 = arith.constant dense<0.000000e+00> : vector<8x32xf32>
    %150 = tpu.matmul %147, %149, %cst_64 {dimension_numbers = #tpu.dot_dimension_numbers<[1], [0], [0], [1], [0, 0, 1, 1], [], []>} : vector<8x32xf32>, vector<32x32xf32>, vector<8x32xf32> -> vector<8x32xf32>
    %151 = vector.broadcast %148 : vector<1x32xf32> to vector<8x32xf32>
    %152 = arith.addf %150, %151 : vector<8x32xf32>
    %c0_65 = arith.constant 0 : index
    %c0_66 = arith.constant 0 : index
    %c0_67 = arith.constant 0 : index
    %153 = vector.load %arg6[%c0_65, %c0_66, %c0_67] : memref<1x8x32xf32, #tpu.memory_space<vmem>>, vector<1x8x32xf32>
    %154 = vector.shape_cast %153 : vector<1x8x32xf32> to vector<8x32xf32>
    %155 = vector.shape_cast %152 : vector<8x32xf32> to vector<1x8x32xf32>
    tpu.vector_store %arg6[%c0_65, %c0_66, %c0_67], %155 {strides = array<i32>} : memref<1x8x32xf32, #tpu.memory_space<vmem>>, vector<1x8x32xf32>,
    return
  }
  func.func @transform_0(%arg0: i32) -> (i32, i32, i32) {
    %c0_i32 = arith.constant 0 : i32
    %c0_i32_0 = arith.constant 0 : i32
    %c0_i32_1 = arith.constant 0 : i32
    return %arg0, %c0_i32, %c0_i32_0 : i32, i32, i32
  }
  func.func @transform_1(%arg0: i32) -> (i32, i32) {
    %c0_i32 = arith.constant 0 : i32
    %c0_i32_0 = arith.constant 0 : i32
    %c0_i32_1 = arith.constant 0 : i32
    return %c0_i32, %c0_i32_0 : i32, i32
  }
  func.func @transform_2(%arg0: i32) -> (i32, i32, i32) {
    %c0_i32 = arith.constant 0 : i32
    %c0_i32_0 = arith.constant 0 : i32
    %c0_i32_1 = arith.constant 0 : i32
    %c0_i32_2 = arith.constant 0 : i32
    return %c0_i32, %c0_i32_0, %c0_i32_1 : i32, i32, i32
  }
  func.func @transform_3(%arg0: i32) -> (i32, i32) {
    %c0_i32 = arith.constant 0 : i32
    %c0_i32_0 = arith.constant 0 : i32
    %c0_i32_1 = arith.constant 0 : i32
    return %c0_i32, %c0_i32_0 : i32, i32
  }
  func.func @transform_4(%arg0: i32) -> (i32, i32) {
    %c0_i32 = arith.constant 0 : i32
    %c0_i32_0 = arith.constant 0 : i32
    %c0_i32_1 = arith.constant 0 : i32
    return %c0_i32, %c0_i32_0 : i32, i32
  }
  func.func @transform_5(%arg0: i32) -> (i32, i32, i32) {
    %c0_i32 = arith.constant 0 : i32
    %c0_i32_0 = arith.constant 0 : i32
    %c0_i32_1 = arith.constant 0 : i32
    return %arg0, %c0_i32, %c0_i32_0 : i32, i32, i32
  }
}

</mosaic_0001>

<llo_original>
// kernel: tpu_custom_call.1
$region0: #{tpu_custom_call.1}
  #allocation0 [shape = 'u32[]', space=smem, size = 0x4, offset = 0x4, fixed_abs, tag = 'smem constant byte address 0x4 - core index']
  #allocation1 [shape = 'u32[144,128]{1,0:T(1,128)}', space=vmem, size = 0x12000, scoped, tag = 'internal scratch']
  %s0 = inlined_call_operand.vmem [shape: f32[4,8,4], index: 0, kind: input, shape index: {}]
  %s1 = inlined_call_operand.vmem [shape: f32[4,32], index: 1, kind: input, shape index: {}]
  %s2 = inlined_call_operand.hbm [shape: f32[4,32,32], index: 2, kind: input, shape index: {}]
  %s3 = inlined_call_operand.vmem [shape: f32[32,32], index: 3, kind: input, shape index: {}]
  %s4 = inlined_call_operand.vmem [shape: f32[11,32], index: 4, kind: input, shape index: {}]
  %s5 = inlined_call_operand.hbm [shape: f32[4,8,32], index: 5, kind: output, shape index: {}]
  %s6 = sld [smem:[#allocation0]]
  $region57: #{tpu_custom_call.1} parent=0
    _
  %s8 = ssub.s32 1, %s6
  %s9 = scalar_select 0, %s8, %s6
  $region1: #{tpu_custom_call.1} parent=0
    #allocation2 [shape = 'u8[65536]{0}', space=vmem, size = 0x10000, scoped, tag = 'input window, operand 2, single buffered']
    #allocation3 [shape = 's32[2]{0}', space=sflag, size = 0x8, scoped, tag = 'scoped memory for tpu_custom_call.1']
    #allocation4 [shape = 's32[2]{0}', space=sflag, size = 0x8, scoped, tag = 'scoped memory for tpu_custom_call.1']
    #allocation5 [shape = 'u8[8192]{0}', space=vmem, size = 0x2000, scoped, tag = 'output window, operand 0']
    %10 = vsyncpa [#allocation3], 0
    %11 = vsyncpa [#allocation4], 0
    %s12 = scalar_lea.sflag [#allocation4], 1
    %13 = vsyncpa %s12, 0
    loop: start=0, step=1, limit=6
    $region2: #{tpu_custom_call.1} parent=1 // loop_pre_header
      _
    $region3: #{tpu_custom_call.1} parent=1 // loop_header
      %s15 = sphi 0, %s19
      %p16 = scmp.ge.s32.totalorder %s15, 6
      %s25 = sphi 0, %s27
      %s28 = sphi 0, %s25
      %s29 = sphi 0, %s28
      %s45 = sphi 0, %s29
      %s49 = sphi 0, %s49
      %s51 = sphi 0, %s49
      %s52 = sphi 0, %s51
      %s66 = sphi 0, %s52
      %s70 = sphi 0, %s70
      %s72 = sphi 0, %s70
      %s73 = sphi 0, %s72
      %s87 = sphi 0, %s73
      %s91 = sphi 0, %s91
      %s93 = sphi 0, %s91
      %s94 = sphi 0, %s93
      %s108 = sphi 0, %s94
      %s112 = sphi 0, %s112
      %s114 = sphi 0, %s112
      %s115 = sphi 0, %s114
      %s129 = sphi 0, %s115
      %s135 = sphi 0, %s137
      %s138 = sphi 0, %s135
      %s139 = sphi 0, %s138
      %s155 = sphi 0, %s139
    $region4: #{tpu_custom_call.1} parent=1 // loop_header_branch
      %18 = sbr.rel (%p16) target = $region8
    $region5: #{tpu_custom_call.1} parent=1 // loop_body
      %s20 = ssub.s32 %s15, 1
      %s21 = ssub.s32 %s15, 2
      %s22 = sadd.s32 %s15, 1
      %s23 = ssub.s32 %s15, %s22
      %p24 = scmp.eq.s32.totalorder %s23, 0
      %s26 = sadd.s32 %s25, 1
      %s27 = scalar_select %p24, %s25, %s26
      %p30 = pneg %p24
      %p31 = scmp.eq.s32.totalorder %s15, 3
      %p32 = por %p30, %p31
      %p33 = scmp.ne.s32.totalorder %s25, %s28
      %p34 = scmp.eq.s32.totalorder %s15, 0
      %p35 = por %p33, %p34
      %p36 = scmp.ne.s32.totalorder %s25, %s28
      %p37 = scmp.eq.s32.totalorder %s20, 3
      %p38 = por %p36, %p37
      %p39 = scmp.ne.s32.totalorder %s28, %s29
      %p40 = scmp.eq.s32.totalorder %s20, 0
      %p41 = por %p39, %p40
      %p42 = scmp.ne.s32.totalorder %s28, %s29
      %p43 = scmp.eq.s32.totalorder %s21, 3
      %p44 = por %p42, %p43
      %p46 = scmp.ne.s32.totalorder %s29, %s45
      %p47 = scmp.eq.s32.totalorder %s21, 0
      %p48 = por %p46, %p47
      %s50 = sadd.s32 %s49, 1
      %p53 = scmp.eq.s32.totalorder %s15, 3
      %p54 = scmp.ne.s32.totalorder %s49, %s51
      %p55 = scmp.eq.s32.totalorder %s15, 0
      %p56 = por %p54, %p55
      %p57 = scmp.ne.s32.totalorder %s49, %s51
      %p58 = scmp.eq.s32.totalorder %s20, 3
      %p59 = por %p57, %p58
      %p60 = scmp.ne.s32.totalorder %s51, %s52
      %p61 = scmp.eq.s32.totalorder %s20, 0
      %p62 = por %p60, %p61
      %p63 = scmp.ne.s32.totalorder %s51, %s52
      %p64 = scmp.eq.s32.totalorder %s21, 3
      %p65 = por %p63, %p64
      %p67 = scmp.ne.s32.totalorder %s52, %s66
      %p68 = scmp.eq.s32.totalorder %s21, 0
      %p69 = por %p67, %p68
      %s71 = sadd.s32 %s70, 1
      %p74 = scmp.eq.s32.totalorder %s15, 3
      %p75 = scmp.ne.s32.totalorder %s70, %s72
      %p76 = scmp.eq.s32.totalorder %s15, 0
      %p77 = por %p75, %p76
      %p78 = scmp.ne.s32.totalorder %s70, %s72
      %p79 = scmp.eq.s32.totalorder %s20, 3
      %p80 = por %p78, %p79
      %p81 = scmp.ne.s32.totalorder %s72, %s73
      %p82 = scmp.eq.s32.totalorder %s20, 0
      %p83 = por %p81, %p82
      %p84 = scmp.ne.s32.totalorder %s72, %s73
      %p85 = scmp.eq.s32.totalorder %s21, 3
      %p86 = por %p84, %p85
      %p88 = scmp.ne.s32.totalorder %s73, %s87
      %p89 = scmp.eq.s32.totalorder %s21, 0
      %p90 = por %p88, %p89
      %s92 = sadd.s32 %s91, 1
      %p95 = scmp.eq.s32.totalorder %s15, 3
      %p96 = scmp.ne.s32.totalorder %s91, %s93
      %p97 = scmp.eq.s32.totalorder %s15, 0
      %p98 = por %p96, %p97
      %p99 = scmp.ne.s32.totalorder %s91, %s93
      %p100 = scmp.eq.s32.totalorder %s20, 3
      %p101 = por %p99, %p100
      %p102 = scmp.ne.s32.totalorder %s93, %s94
      %p103 = scmp.eq.s32.totalorder %s20, 0
      %p104 = por %p102, %p103
      %p105 = scmp.ne.s32.totalorder %s93, %s94
      %p106 = scmp.eq.s32.totalorder %s21, 3
      %p107 = por %p105, %p106
      %p109 = scmp.ne.s32.totalorder %s94, %s108
      %p110 = scmp.eq.s32.totalorder %s21, 0
      %p111 = por %p109, %p110
      %s113 = sadd.s32 %s112, 1
      %p116 = scmp.eq.s32.totalorder %s15, 3
      %p117 = scmp.ne.s32.totalorder %s112, %s114
      %p118 = scmp.eq.s32.totalorder %s15, 0
      %p119 = por %p117, %p118
      %p120 = scmp.ne.s32.totalorder %s112, %s114
      %p121 = scmp.eq.s32.totalorder %s20, 3
      %p122 = por %p120, %p121
      %p123 = scmp.ne.s32.totalorder %s114, %s115
      %p124 = scmp.eq.s32.totalorder %s20, 0
      %p125 = por %p123, %p124
      %p126 = scmp.ne.s32.totalorder %s114, %s115
      %p127 = scmp.eq.s32.totalorder %s21, 3
      %p128 = por %p126, %p127
      %p130 = scmp.ne.s32.totalorder %s115, %s129
      %p131 = scmp.eq.s32.totalorder %s21, 0
      %p132 = por %p130, %p131
      %s133 = ssub.s32 %s15, %s22
      %p134 = scmp.eq.s32.totalorder %s133, 0
      %s136 = sadd.s32 %s135, 1
      %s137 = scalar_select %p134, %s135, %s136
      %p140 = pneg %p134
      %p141 = scmp.eq.s32.totalorder %s15, 3
      %p142 = por %p140, %p141
      %p143 = scmp.ne.s32.totalorder %s135, %s138
      %p144 = scmp.eq.s32.totalorder %s15, 0
      %p145 = por %p143, %p144
      %p146 = scmp.ne.s32.totalorder %s135, %s138
      %p147 = scmp.eq.s32.totalorder %s20, 3
      %p148 = por %p146, %p147
      %p149 = scmp.ne.s32.totalorder %s138, %s139
      %p150 = scmp.eq.s32.totalorder %s20, 0
      %p151 = por %p149, %p150
      %p152 = scmp.ne.s32.totalorder %s138, %s139
      %p153 = scmp.eq.s32.totalorder %s21, 3
      %p154 = por %p152, %p153
      %p156 = scmp.ne.s32.totalorder %s139, %s155
      %p157 = scmp.eq.s32.totalorder %s21, 0
      %p158 = por %p156, %p157
      %p159 = scmp.le.s32.totalorder 1, %s15
      %p160 = scmp.lt.s32.totalorder %s15, 5
      %p161 = pnand %p159, %p160
      %p162 = pneg %p161
      // Predicated region
      $region9: #{tpu_custom_call.1} parent=5 // pred_check
        _
      $region10: #{tpu_custom_call.1} parent=5 // pred_check_branch
        %164 = sbr.rel (%p161) target = $region12
      $region11: #{tpu_custom_call.1} parent=5 // pred_region
        %s165 = ssub.s32 %s15, 1
        // Predicated region
        $region13: #{tpu_custom_call.1} parent=11 // pred_check
          %p166 = pneg %p62
        $region14: #{tpu_custom_call.1} parent=11 // pred_check_branch
          %168 = sbr.rel (%p166) target = $region16
        $region15: #{tpu_custom_call.1} parent=11 // pred_region
          _
        $region16: #{tpu_custom_call.1} parent=11 // pred_fallthru
          _
        // Predicated region
        $region17: #{tpu_custom_call.1} parent=11 // pred_check
          %p169 = pneg %p83
        $region18: #{tpu_custom_call.1} parent=11 // pred_check_branch
          %171 = sbr.rel (%p169) target = $region20
        $region19: #{tpu_custom_call.1} parent=11 // pred_region
          %s173 = ssub.s32 2048, 2048
          %174 = vsyncadd [#allocation3], %s173
          %s175 = sshll.u32 [#allocation2], 4
          %s176 = int_to_ptr.vmem [resolvable:$true] %s175
          %181 = dma.hbm_to_vmem [thread:$0]  %s2, 2048, %s176, [#allocation3], 128, 128, 8
        $region20: #{tpu_custom_call.1} parent=11 // pred_fallthru
          _
        // Predicated region
        $region21: #{tpu_custom_call.1} parent=11 // pred_check
          %p182 = pneg %p104
        $region22: #{tpu_custom_call.1} parent=11 // pred_check_branch
          %184 = sbr.rel (%p182) target = $region24
        $region23: #{tpu_custom_call.1} parent=11 // pred_region
          _
        $region24: #{tpu_custom_call.1} parent=11 // pred_fallthru
          _
        // Predicated region
        $region25: #{tpu_custom_call.1} parent=11 // pred_check
          %p185 = pneg %p125
        $region26: #{tpu_custom_call.1} parent=11 // pred_check_branch
          %187 = sbr.rel (%p185) target = $region28
        $region27: #{tpu_custom_call.1} parent=11 // pred_region
          _
        $region28: #{tpu_custom_call.1} parent=11 // pred_fallthru
          _
      $region12: #{tpu_custom_call.1} parent=5 // pred_fallthru
        _
      %p188 = scmp.lt.s32.totalorder %s15, 4
      // Predicated region
      $region29: #{tpu_custom_call.1} parent=5 // pred_check
        %p189 = pneg %p188
      $region30: #{tpu_custom_call.1} parent=5 // pred_check_branch
        %191 = sbr.rel (%p189) target = $region32
      $region31: #{tpu_custom_call.1} parent=5 // pred_region
        // Predicated region
        $region33: #{tpu_custom_call.1} parent=31 // pred_check
          %p192 = pneg %p35
        $region34: #{tpu_custom_call.1} parent=31 // pred_check_branch
          %194 = sbr.rel (%p192) target = $region36
        $region35: #{tpu_custom_call.1} parent=31 // pred_region
          %p195 = scmp.lt.s32.totalorder %s15, 3
          %s196 = scalar_select %p195, %s15, 3
          %s197 = smul.addr %s196, 8
          %s198 = scalar_lea.vmem %s0, %s197
        $region36: #{tpu_custom_call.1} parent=31 // pred_fallthru
          _
      $region32: #{tpu_custom_call.1} parent=5 // pred_fallthru
        _
      %p199 = scmp.le.s32.totalorder 1, %s15
      %p200 = scmp.lt.s32.totalorder %s15, 5
      %p201 = pnand %p199, %p200
      %p202 = pneg %p201
      // Predicated region
      $region37: #{tpu_custom_call.1} parent=5 // pred_check
        _
      $region38: #{tpu_custom_call.1} parent=5 // pred_check_branch
        %204 = sbr.rel (%p201) target = $region40
      $region39: #{tpu_custom_call.1} parent=5 // pred_region
        %s205 = ssub.s32 %s15, 1
        // Predicated region
        $region41: #{tpu_custom_call.1} parent=39 // pred_check
          %p206 = pneg %p83
        $region42: #{tpu_custom_call.1} parent=39 // pred_check_branch
          %208 = sbr.rel (%p206) target = $region44
        $region43: #{tpu_custom_call.1} parent=39 // pred_region
          %209 = dma.done [#allocation3], 2048
        $region44: #{tpu_custom_call.1} parent=39 // pred_fallthru
          _
        %p210 = scmp.lt.s32.totalorder %s20, 3
        %s211 = scalar_select %p210, %s20, 3
        %s212 = smul.addr %s211, 8
        %s213 = scalar_lea.vmem %s0, %s212
        %p214 = pneg %p41
        %p215 = pneg %p38
        %p216 = pneg %p62
        %p217 = pneg %p59
        %p218 = pneg %p83
        %p219 = pneg %p80
        %p220 = pneg %p104
        %p221 = pneg %p101
        %p222 = pneg %p125
        %p223 = pneg %p122
        %p224 = pneg %p151
        %p225 = pneg %p148
        %s226 = sand.u32 %s138, 1
        %s227 = scalar_lea.sflag [#allocation4], %s226
        %s228 = sand.u32 %s138, 1
        %s229 = smul.addr %s228, 8
        %s230 = scalar_lea.vmem [#allocation5], %s229
        %p231 = scmp.lt.s32.totalorder %s20, 3
        %s232 = scalar_select %p231, %s20, 3
        %s233 = smul.addr %s232, 8
        %s234 = scalar_lea.vmem %s0, %s233
        %v235 = vld [vmem:[%s234] sm:$0xff]
        %v236 = vld [vmem:[%s1] sm:$0xf]
        %vm237 = vcmask 31744
        %v239 = vsel %vm237, %v235, 0
        %vm241 = vcmask 1043456
        %v243 = vsel %vm241, %v236, 0
        %245 = vmatprep.subr.mxu0 0.0
        %246 = vmatpush1.msra.mxu0 0.0
        %247 = vmatprep.subr.mxu0 0.0
        %248 = vmatpush1.msra.mxu0 0.0
        %249 = vmatprep.subr.mxu0 0.0
        %250 = vmatpush1.msra.mxu0 0.0
        %251 = vmatprep.subr.mxu0 0.0
        %252 = vmatpush1.msra.mxu0 0.0
        %253 = vmatprep.subr.mxu0 0.0
        %254 = vmatpush1.msra.mxu0 0.0
        %255 = vmatprep.subr.mxu0 0.0
        %256 = vmatpush1.msra.mxu0 0.0
        %257 = vmatprep.subr.mxu0 0.0
        %258 = vmatpush1.msra.mxu0 0.0
        %259 = vmatprep.subr.mxu0 0.0
        %260 = vmatpush1.msra.mxu0 0.0
        %261 = vmatprep.subr.mxu0 0.0
        %262 = vmatpush1.msra.mxu0 0.0
        %263 = vmatprep.subr.mxu0 0.0
        %264 = vmatpush1.msra.mxu0 0.0
        %265 = vmatprep.subr.mxu0 0.0
        %266 = vmatpush1.msra.mxu0 0.0
        %267 = vmatprep.subr.mxu0 0.0
        %268 = vmatpush1.msra.mxu0 0.0
        %269 = vmatprep.subr.mxu0 0.0
        %270 = vmatpush1.msra.mxu0 0.0
        %271 = vmatprep.subr.mxu0 0.0
        %272 = vmatpush1.msra.mxu0 0.0
        %273 = vmatprep.subr.mxu0 0.0
        %274 = vmatpush1.msra.mxu0 0.0
        %275 = vmatprep.subr.mxu0 0.0
        %276 = vmatpush1.msra.mxu0 %v243
        %277 = vmatprep.subr.mxu0 0.0
        %278 = vmatpush2.msra.mxu0 0.0
        %279 = vmatprep.subr.mxu0 0.0
        %280 = vmatpush2.msra.mxu0 0.0
        %281 = vmatprep.subr.mxu0 0.0
        %282 = vmatpush2.msra.mxu0 0.0
        %283 = vmatprep.subr.mxu0 0.0
        %284 = vmatpush2.msra.mxu0 0.0
        %285 = vmatprep.subr.mxu0 0.0
        %286 = vmatpush2.msra.mxu0 0.0
        %287 = vmatprep.subr.mxu0 0.0
        %288 = vmatpush2.msra.mxu0 0.0
        %289 = vmatprep.subr.mxu0 0.0
        %290 = vmatpush2.msra.mxu0 0.0
        %291 = vmatprep.subr.mxu0 0.0
        %292 = vmatpush2.msra.mxu0 0.0
        %293 = vmatprep.subr.mxu0 0.0
        %294 = vmatpush2.msra.mxu0 0.0
        %295 = vmatprep.subr.mxu0 0.0
        %296 = vmatpush2.msra.mxu0 0.0
        %297 = vmatprep.subr.mxu0 0.0
        %298 = vmatpush2.msra.mxu0 0.0
        %299 = vmatprep.subr.mxu0 0.0
        %300 = vmatpush2.msra.mxu0 0.0
        %301 = vmatprep.subr.mxu0 0.0
        %302 = vmatpush2.msra.mxu0 0.0
        %303 = vmatprep.subr.mxu0 0.0
        %304 = vmatpush2.msra.mxu0 0.0
        %305 = vmatprep.subr.mxu0 0.0
        %306 = vmatpush2.msra.mxu0 0.0
        %307 = vmatprep.subr.mxu0 0.0
        %308 = vmatpush2.msra.mxu0 0.0
        %309 = vmatprep.mubr.f32.mxu0 0.0
        %310 = vmatmul.mubr.f32.gmra.mxu0 %v239
        %v311 = vpop.f32.mrf.mxu0
        %v312 = vadd.f32 0.0, %v311
        %v313 = vpop.f32.mrf.mxu0
        %314 = vdwg.mxu0
        %v315 = vld [vmem:[%s4] sm:$0x1]
        %v316 = vld [vmem:[%s4 + $0x1] sm:$0x1]
        %vm317 = vcmask 261120
        %v318 = vsel %vm317, %v312, 0.0
        %v319 = vrot.slane %v318, 4
        %v320 = vadd.f32 %v318, %v319
        %v321 = vrot.slane %v320, 2
        %v322 = vadd.f32 %v320, %v321
        %v323 = vrot.slane %v322, 1
        %v324 = vadd.f32 %v322, %v323
        %v325 = vmul.f32 %v312, %v312
        %v326 = vsel %vm317, %v325, 0.0
        %v327 = vrot.slane %v326, 4
        %v328 = vadd.f32 %v326, %v327
        %v329 = vrot.slane %v328, 2
        %v330 = vadd.f32 %v328, %v329
        %v331 = vrot.slane %v330, 1
        %v332 = vadd.f32 %v330, %v331
        %v333 = vmul.f32 %v324, 0.125
        %v334 = vmul.f32 %v332, 0.125
        %v335 = vmul.f32 %v333, %v333
        %v336 = vsub.f32 %v334, %v335
        %v337 = vadd.f32 %v336, 0.001
        %v338 = vrsqrt.pop %v337
        %v339 = vmul.f32 %v315, %v338
        %v340 = vmul.f32 %v333, %v339
        %v341 = vsub.f32 %v316, %v340
        %v342 = vlaneseq
        %v343 = vshrl.u32 %v342, 7
        %v344 = vsub.s32 0, %v343
        %v345 = vrot.slane %v339, %v344
        %v346 = vmul.f32 %v312, %v345
        %v347 = vlaneseq
        %v348 = vshrl.u32 %v347, 7
        %v349 = vsub.s32 0, %v348
        %v350 = vrot.slane %v341, %v349
        %v351 = vadd.f32 %v346, %v350
        %v352 = vmul.f32 %v351, 0.01
        %v353 = vmax.f32 %v351, %v352
        %v354 = vld [vmem:[#allocation2] sm:$0xff]
        %v355 = vld [vmem:[#allocation2 + $0x8] sm:$0xff]
        %v356 = vld [vmem:[#allocation2 + $0x10] sm:$0xff]
        %v357 = vld [vmem:[#allocation2 + $0x18] sm:$0xff]
        %v359 = vsel %vm317, %v353, 0
        %361 = vmatprep.subr.mxu0 0.0
        %362 = vmatpush1.msra.mxu0 0.0
        %363 = vmatprep.subr.mxu0 0.0
        %364 = vmatpush1.msra.mxu0 0.0
        %365 = vmatprep.subr.mxu0 0.0
        %366 = vmatpush1.msra.mxu0 0.0
        %367 = vmatprep.subr.mxu0 0.0
        %368 = vmatpush1.msra.mxu0 0.0
        %369 = vmatprep.subr.mxu0 0.0
        %370 = vmatpush1.msra.mxu0 0.0
        %371 = vmatprep.subr.mxu0 0.0
        %372 = vmatpush1.msra.mxu0 0.0
        %373 = vmatprep.subr.mxu0 0.0
        %374 = vmatpush1.msra.mxu0 0.0
        %375 = vmatprep.subr.mxu0 0.0
        %376 = vmatpush1.msra.mxu0 0.0
        %377 = vmatprep.subr.mxu0 0.0
        %378 = vmatpush1.msra.mxu0 0.0
        %379 = vmatprep.subr.mxu0 0.0
        %380 = vmatpush1.msra.mxu0 0.0
        %381 = vmatprep.subr.mxu0 0.0
        %382 = vmatpush1.msra.mxu0 0.0
        %383 = vmatprep.subr.mxu0 0.0
        %384 = vmatpush1.msra.mxu0 0.0
        %385 = vmatprep.subr.mxu0 0.0
        %386 = vmatpush1.msra.mxu0 %v357
        %387 = vmatprep.subr.mxu0 0.0
        %388 = vmatpush1.msra.mxu0 %v356
        %389 = vmatprep.subr.mxu0 0.0
        %390 = vmatpush1.msra.mxu0 %v355
        %391 = vmatprep.subr.mxu0 0.0
        %392 = vmatpush1.msra.mxu0 %v354
        %393 = vmatprep.subr.mxu0 0.0
        %394 = vmatpush2.msra.mxu0 0.0
        %395 = vmatprep.subr.mxu0 0.0
        %396 = vmatpush2.msra.mxu0 0.0
        %397 = vmatprep.subr.mxu0 0.0
        %398 = vmatpush2.msra.mxu0 0.0
        %399 = vmatprep.subr.mxu0 0.0
        %400 = vmatpush2.msra.mxu0 0.0
        %401 = vmatprep.subr.mxu0 0.0
        %402 = vmatpush2.msra.mxu0 0.0
        %403 = vmatprep.subr.mxu0 0.0
        %404 = vmatpush2.msra.mxu0 0.0
        %405 = vmatprep.subr.mxu0 0.0
        %406 = vmatpush2.msra.mxu0 0.0
        %407 = vmatprep.subr.mxu0 0.0
        %408 = vmatpush2.msra.mxu0 0.0
        %409 = vmatprep.subr.mxu0 0.0
        %410 = vmatpush2.msra.mxu0 0.0
        %411 = vmatprep.subr.mxu0 0.0
        %412 = vmatpush2.msra.mxu0 0.0
        %413 = vmatprep.subr.mxu0 0.0
        %414 = vmatpush2.msra.mxu0 0.0
        %415 = vmatprep.subr.mxu0 0.0
        %416 = vmatpush2.msra.mxu0 0.0
        %417 = vmatprep.subr.mxu0 0.0
        %418 = vmatpush2.msra.mxu0 0.0
        %419 = vmatprep.subr.mxu0 0.0
        %420 = vmatpush2.msra.mxu0 0.0
        %421 = vmatprep.subr.mxu0 0.0
        %422 = vmatpush2.msra.mxu0 0.0
        %423 = vmatprep.subr.mxu0 0.0
        %424 = vmatpush2.msra.mxu0 0.0
        %425 = vmatprep.mubr.f32.mxu0 0.0
        %426 = vmatmul.mubr.f32.gmra.mxu0 %v359
        %v427 = vpop.f32.mrf.mxu0
        %v428 = vadd.f32 0.0, %v427
        %v429 = vpop.f32.mrf.mxu0
        %430 = vdwg.mxu0
        %v431 = vld [vmem:[%s4 + $0x2] sm:$0x1]
        %v432 = vld [vmem:[%s4 + $0x6] sm:$0x1]
        %v433 = vsel %vm317, %v428, 0.0
        %v434 = vrot.slane %v433, 4
        %v435 = vadd.f32 %v433, %v434
        %v436 = vrot.slane %v435, 2
        %v437 = vadd.f32 %v435, %v436
        %v438 = vrot.slane %v437, 1
        %v439 = vadd.f32 %v437, %v438
        %v440 = vmul.f32 %v428, %v428
        %v441 = vsel %vm317, %v440, 0.0
        %v442 = vrot.slane %v441, 4
        %v443 = vadd.f32 %v441, %v442
        %v444 = vrot.slane %v443, 2
        %v445 = vadd.f32 %v443, %v444
        %v446 = vrot.slane %v445, 1
        %v447 = vadd.f32 %v445, %v446
        %v448 = vmul.f32 %v439, 0.125
        %v449 = vmul.f32 %v447, 0.125
        %v450 = vmul.f32 %v448, %v448
        %v451 = vsub.f32 %v449, %v450
        %v452 = vadd.f32 %v451, 0.001
        %v453 = vrsqrt.pop %v452
        %v454 = vmul.f32 %v431, %v453
        %v455 = vmul.f32 %v448, %v454
        %v456 = vsub.f32 %v432, %v455
        %v457 = vlaneseq
        %v458 = vshrl.u32 %v457, 7
        %v459 = vsub.s32 0, %v458
        %v460 = vrot.slane %v454, %v459
        %v461 = vmul.f32 %v428, %v460
        %v462 = vlaneseq
        %v463 = vshrl.u32 %v462, 7
        %v464 = vsub.s32 0, %v463
        %v465 = vrot.slane %v456, %v464
        %v466 = vadd.f32 %v461, %v465
        %v467 = vmul.f32 %v466, 0.01
        %v468 = vmax.f32 %v466, %v467
        %s469 = scalar_lea.vmem [#allocation2], 32
        %v470 = vld [vmem:[%s469] sm:$0xff]
        %v471 = vld [vmem:[%s469 + $0x8] sm:$0xff]
        %v472 = vld [vmem:[%s469 + $0x10] sm:$0xff]
        %v473 = vld [vmem:[%s469 + $0x18] sm:$0xff]
        %v475 = vsel %vm317, %v468, 0
        %477 = vmatprep.subr.mxu0 0.0
        %478 = vmatpush1.msra.mxu0 0.0
        %479 = vmatprep.subr.mxu0 0.0
        %480 = vmatpush1.msra.mxu0 0.0
        %481 = vmatprep.subr.mxu0 0.0
        %482 = vmatpush1.msra.mxu0 0.0
        %483 = vmatprep.subr.mxu0 0.0
        %484 = vmatpush1.msra.mxu0 0.0
        %485 = vmatprep.subr.mxu0 0.0
        %486 = vmatpush1.msra.mxu0 0.0
        %487 = vmatprep.subr.mxu0 0.0
        %488 = vmatpush1.msra.mxu0 0.0
        %489 = vmatprep.subr.mxu0 0.0
        %490 = vmatpush1.msra.mxu0 0.0
        %491 = vmatprep.subr.mxu0 0.0
        %492 = vmatpush1.msra.mxu0 0.0
        %493 = vmatprep.subr.mxu0 0.0
        %494 = vmatpush1.msra.mxu0 0.0
        %495 = vmatprep.subr.mxu0 0.0
        %496 = vmatpush1.msra.mxu0 0.0
        %497 = vmatprep.subr.mxu0 0.0
        %498 = vmatpush1.msra.mxu0 0.0
        %499 = vmatprep.subr.mxu0 0.0
        %500 = vmatpush1.msra.mxu0 0.0
        %501 = vmatprep.subr.mxu0 0.0
        %502 = vmatpush1.msra.mxu0 %v473
        %503 = vmatprep.subr.mxu0 0.0
        %504 = vmatpush1.msra.mxu0 %v472
        %505 = vmatprep.subr.mxu0 0.0
        %506 = vmatpush1.msra.mxu0 %v471
        %507 = vmatprep.subr.mxu0 0.0
        %508 = vmatpush1.msra.mxu0 %v470
        %509 = vmatprep.subr.mxu0 0.0
        %510 = vmatpush2.msra.mxu0 0.0
        %511 = vmatprep.subr.mxu0 0.0
        %512 = vmatpush2.msra.mxu0 0.0
        %513 = vmatprep.subr.mxu0 0.0
        %514 = vmatpush2.msra.mxu0 0.0
        %515 = vmatprep.subr.mxu0 0.0
        %516 = vmatpush2.msra.mxu0 0.0
        %517 = vmatprep.subr.mxu0 0.0
        %518 = vmatpush2.msra.mxu0 0.0
        %519 = vmatprep.subr.mxu0 0.0
        %520 = vmatpush2.msra.mxu0 0.0
        %521 = vmatprep.subr.mxu0 0.0
        %522 = vmatpush2.msra.mxu0 0.0
        %523 = vmatprep.subr.mxu0 0.0
        %524 = vmatpush2.msra.mxu0 0.0
        %525 = vmatprep.subr.mxu0 0.0
        %526 = vmatpush2.msra.mxu0 0.0
        %527 = vmatprep.subr.mxu0 0.0
        %528 = vmatpush2.msra.mxu0 0.0
        %529 = vmatprep.subr.mxu0 0.0
        %530 = vmatpush2.msra.mxu0 0.0
        %531 = vmatprep.subr.mxu0 0.0
        %532 = vmatpush2.msra.mxu0 0.0
        %533 = vmatprep.subr.mxu0 0.0
        %534 = vmatpush2.msra.mxu0 0.0
        %535 = vmatprep.subr.mxu0 0.0
        %536 = vmatpush2.msra.mxu0 0.0
        %537 = vmatprep.subr.mxu0 0.0
        %538 = vmatpush2.msra.mxu0 0.0
        %539 = vmatprep.subr.mxu0 0.0
        %540 = vmatpush2.msra.mxu0 0.0
        %541 = vmatprep.mubr.f32.mxu0 0.0
        %542 = vmatmul.mubr.f32.gmra.mxu0 %v475
        %v543 = vpop.f32.mrf.mxu0
        %v544 = vadd.f32 0.0, %v543
        %v545 = vpop.f32.mrf.mxu0
        %546 = vdwg.mxu0
        %v547 = vld [vmem:[%s4 + $0x3] sm:$0x1]
        %v548 = vld [vmem:[%s4 + $0x7] sm:$0x1]
        %v549 = vsel %vm317, %v544, 0.0
        %v550 = vrot.slane %v549, 4
        %v551 = vadd.f32 %v549, %v550
        %v552 = vrot.slane %v551, 2
        %v553 = vadd.f32 %v551, %v552
        %v554 = vrot.slane %v553, 1
        %v555 = vadd.f32 %v553, %v554
        %v556 = vmul.f32 %v544, %v544
        %v557 = vsel %vm317, %v556, 0.0
        %v558 = vrot.slane %v557, 4
        %v559 = vadd.f32 %v557, %v558
        %v560 = vrot.slane %v559, 2
        %v561 = vadd.f32 %v559, %v560
        %v562 = vrot.slane %v561, 1
        %v563 = vadd.f32 %v561, %v562
        %v564 = vmul.f32 %v555, 0.125
        %v565 = vmul.f32 %v563, 0.125
        %v566 = vmul.f32 %v564, %v564
        %v567 = vsub.f32 %v565, %v566
        %v568 = vadd.f32 %v567, 0.001
        %v569 = vrsqrt.pop %v568
        %v570 = vmul.f32 %v547, %v569
        %v571 = vmul.f32 %v564, %v570
        %v572 = vsub.f32 %v548, %v571
        %v573 = vlaneseq
        %v574 = vshrl.u32 %v573, 7
        %v575 = vsub.s32 0, %v574
        %v576 = vrot.slane %v570, %v575
        %v577 = vmul.f32 %v544, %v576
        %v578 = vlaneseq
        %v579 = vshrl.u32 %v578, 7
        %v580 = vsub.s32 0, %v579
        %v581 = vrot.slane %v572, %v580
        %v582 = vadd.f32 %v577, %v581
        %v583 = vmul.f32 %v582, 0.01
        %v584 = vmax.f32 %v582, %v583
        %v585 = vadd.f32 %v353, %v584
        %s586 = scalar_lea.vmem [#allocation2], 64
        %v587 = vld [vmem:[%s586] sm:$0xff]
        %v588 = vld [vmem:[%s586 + $0x8] sm:$0xff]
        %v589 = vld [vmem:[%s586 + $0x10] sm:$0xff]
        %v590 = vld [vmem:[%s586 + $0x18] sm:$0xff]
        %v592 = vsel %vm317, %v585, 0
        %594 = vmatprep.subr.mxu0 0.0
        %595 = vmatpush1.msra.mxu0 0.0
        %596 = vmatprep.subr.mxu0 0.0
        %597 = vmatpush1.msra.mxu0 0.0
        %598 = vmatprep.subr.mxu0 0.0
        %599 = vmatpush1.msra.mxu0 0.0
        %600 = vmatprep.subr.mxu0 0.0
        %601 = vmatpush1.msra.mxu0 0.0
        %602 = vmatprep.subr.mxu0 0.0
        %603 = vmatpush1.msra.mxu0 0.0
        %604 = vmatprep.subr.mxu0 0.0
        %605 = vmatpush1.msra.mxu0 0.0
        %606 = vmatprep.subr.mxu0 0.0
        %607 = vmatpush1.msra.mxu0 0.0
        %608 = vmatprep.subr.mxu0 0.0
        %609 = vmatpush1.msra.mxu0 0.0
        %610 = vmatprep.subr.mxu0 0.0
        %611 = vmatpush1.msra.mxu0 0.0
        %612 = vmatprep.subr.mxu0 0.0
        %613 = vmatpush1.msra.mxu0 0.0
        %614 = vmatprep.subr.mxu0 0.0
        %615 = vmatpush1.msra.mxu0 0.0
        %616 = vmatprep.subr.mxu0 0.0
        %617 = vmatpush1.msra.mxu0 0.0
        %618 = vmatprep.subr.mxu0 0.0
        %619 = vmatpush1.msra.mxu0 %v590
        %620 = vmatprep.subr.mxu0 0.0
        %621 = vmatpush1.msra.mxu0 %v589
        %622 = vmatprep.subr.mxu0 0.0
        %623 = vmatpush1.msra.mxu0 %v588
        %624 = vmatprep.subr.mxu0 0.0
        %625 = vmatpush1.msra.mxu0 %v587
        %626 = vmatprep.subr.mxu0 0.0
        %627 = vmatpush2.msra.mxu0 0.0
        %628 = vmatprep.subr.mxu0 0.0
        %629 = vmatpush2.msra.mxu0 0.0
        %630 = vmatprep.subr.mxu0 0.0
        %631 = vmatpush2.msra.mxu0 0.0
        %632 = vmatprep.subr.mxu0 0.0
        %633 = vmatpush2.msra.mxu0 0.0
        %634 = vmatprep.subr.mxu0 0.0
        %635 = vmatpush2.msra.mxu0 0.0
        %636 = vmatprep.subr.mxu0 0.0
        %637 = vmatpush2.msra.mxu0 0.0
        %638 = vmatprep.subr.mxu0 0.0
        %639 = vmatpush2.msra.mxu0 0.0
        %640 = vmatprep.subr.mxu0 0.0
        %641 = vmatpush2.msra.mxu0 0.0
        %642 = vmatprep.subr.mxu0 0.0
        %643 = vmatpush2.msra.mxu0 0.0
        %644 = vmatprep.subr.mxu0 0.0
        %645 = vmatpush2.msra.mxu0 0.0
        %646 = vmatprep.subr.mxu0 0.0
        %647 = vmatpush2.msra.mxu0 0.0
        %648 = vmatprep.subr.mxu0 0.0
        %649 = vmatpush2.msra.mxu0 0.0
        %650 = vmatprep.subr.mxu0 0.0
        %651 = vmatpush2.msra.mxu0 0.0
        %652 = vmatprep.subr.mxu0 0.0
        %653 = vmatpush2.msra.mxu0 0.0
        %654 = vmatprep.subr.mxu0 0.0
        %655 = vmatpush2.msra.mxu0 0.0
        %656 = vmatprep.subr.mxu0 0.0
        %657 = vmatpush2.msra.mxu0 0.0
        %658 = vmatprep.mubr.f32.mxu0 0.0
        %659 = vmatmul.mubr.f32.gmra.mxu0 %v592
        %v660 = vpop.f32.mrf.mxu0
        %v661 = vadd.f32 0.0, %v660
        %v662 = vpop.f32.mrf.mxu0
        %663 = vdwg.mxu0
        %v664 = vld [vmem:[%s4 + $0x4] sm:$0x1]
        %v665 = vld [vmem:[%s4 + $0x8] sm:$0x1]
        %v666 = vsel %vm317, %v661, 0.0
        %v667 = vrot.slane %v666, 4
        %v668 = vadd.f32 %v666, %v667
        %v669 = vrot.slane %v668, 2
        %v670 = vadd.f32 %v668, %v669
        %v671 = vrot.slane %v670, 1
        %v672 = vadd.f32 %v670, %v671
        %v673 = vmul.f32 %v661, %v661
        %v674 = vsel %vm317, %v673, 0.0
        %v675 = vrot.slane %v674, 4
        %v676 = vadd.f32 %v674, %v675
        %v677 = vrot.slane %v676, 2
        %v678 = vadd.f32 %v676, %v677
        %v679 = vrot.slane %v678, 1
        %v680 = vadd.f32 %v678, %v679
        %v681 = vmul.f32 %v672, 0.125
        %v682 = vmul.f32 %v680, 0.125
        %v683 = vmul.f32 %v681, %v681
        %v684 = vsub.f32 %v682, %v683
        %v685 = vadd.f32 %v684, 0.001
        %v686 = vrsqrt.pop %v685
        %v687 = vmul.f32 %v664, %v686
        %v688 = vmul.f32 %v681, %v687
        %v689 = vsub.f32 %v665, %v688
        %v690 = vlaneseq
        %v691 = vshrl.u32 %v690, 7
        %v692 = vsub.s32 0, %v691
        %v693 = vrot.slane %v687, %v692
        %v694 = vmul.f32 %v661, %v693
        %v695 = vlaneseq
        %v696 = vshrl.u32 %v695, 7
        %v697 = vsub.s32 0, %v696
        %v698 = vrot.slane %v689, %v697
        %v699 = vadd.f32 %v694, %v698
        %v700 = vmul.f32 %v699, 0.01
        %v701 = vmax.f32 %v699, %v700
        %s702 = scalar_lea.vmem [#allocation2], 96
        %v703 = vld [vmem:[%s702] sm:$0xff]
        %v704 = vld [vmem:[%s702 + $0x8] sm:$0xff]
        %v705 = vld [vmem:[%s702 + $0x10] sm:$0xff]
        %v706 = vld [vmem:[%s702 + $0x18] sm:$0xff]
        %v708 = vsel %vm317, %v701, 0
        %710 = vmatprep.subr.mxu0 0.0
        %711 = vmatpush1.msra.mxu0 0.0
        %712 = vmatprep.subr.mxu0 0.0
        %713 = vmatpush1.msra.mxu0 0.0
        %714 = vmatprep.subr.mxu0 0.0
        %715 = vmatpush1.msra.mxu0 0.0
        %716 = vmatprep.subr.mxu0 0.0
        %717 = vmatpush1.msra.mxu0 0.0
        %718 = vmatprep.subr.mxu0 0.0
        %719 = vmatpush1.msra.mxu0 0.0
        %720 = vmatprep.subr.mxu0 0.0
        %721 = vmatpush1.msra.mxu0 0.0
        %722 = vmatprep.subr.mxu0 0.0
        %723 = vmatpush1.msra.mxu0 0.0
        %724 = vmatprep.subr.mxu0 0.0
        %725 = vmatpush1.msra.mxu0 0.0
        %726 = vmatprep.subr.mxu0 0.0
        %727 = vmatpush1.msra.mxu0 0.0
        %728 = vmatprep.subr.mxu0 0.0
        %729 = vmatpush1.msra.mxu0 0.0
        %730 = vmatprep.subr.mxu0 0.0
        %731 = vmatpush1.msra.mxu0 0.0
        %732 = vmatprep.subr.mxu0 0.0
        %733 = vmatpush1.msra.mxu0 0.0
        %734 = vmatprep.subr.mxu0 0.0
        %735 = vmatpush1.msra.mxu0 %v706
        %736 = vmatprep.subr.mxu0 0.0
        %737 = vmatpush1.msra.mxu0 %v705
        %738 = vmatprep.subr.mxu0 0.0
        %739 = vmatpush1.msra.mxu0 %v704
        %740 = vmatprep.subr.mxu0 0.0
        %741 = vmatpush1.msra.mxu0 %v703
        %742 = vmatprep.subr.mxu0 0.0
        %743 = vmatpush2.msra.mxu0 0.0
        %744 = vmatprep.subr.mxu0 0.0
        %745 = vmatpush2.msra.mxu0 0.0
        %746 = vmatprep.subr.mxu0 0.0
        %747 = vmatpush2.msra.mxu0 0.0
        %748 = vmatprep.subr.mxu0 0.0
        %749 = vmatpush2.msra.mxu0 0.0
        %750 = vmatprep.subr.mxu0 0.0
        %751 = vmatpush2.msra.mxu0 0.0
        %752 = vmatprep.subr.mxu0 0.0
        %753 = vmatpush2.msra.mxu0 0.0
        %754 = vmatprep.subr.mxu0 0.0
        %755 = vmatpush2.msra.mxu0 0.0
        %756 = vmatprep.subr.mxu0 0.0
        %757 = vmatpush2.msra.mxu0 0.0
        %758 = vmatprep.subr.mxu0 0.0
        %759 = vmatpush2.msra.mxu0 0.0
        %760 = vmatprep.subr.mxu0 0.0
        %761 = vmatpush2.msra.mxu0 0.0
        %762 = vmatprep.subr.mxu0 0.0
        %763 = vmatpush2.msra.mxu0 0.0
        %764 = vmatprep.subr.mxu0 0.0
        %765 = vmatpush2.msra.mxu0 0.0
        %766 = vmatprep.subr.mxu0 0.0
        %767 = vmatpush2.msra.mxu0 0.0
        %768 = vmatprep.subr.mxu0 0.0
        %769 = vmatpush2.msra.mxu0 0.0
        %770 = vmatprep.subr.mxu0 0.0
        %771 = vmatpush2.msra.mxu0 0.0
        %772 = vmatprep.subr.mxu0 0.0
        %773 = vmatpush2.msra.mxu0 0.0
        %774 = vmatprep.mubr.f32.mxu0 0.0
        %775 = vmatmul.mubr.f32.gmra.mxu0 %v708
        %v776 = vpop.f32.mrf.mxu0
        %v777 = vadd.f32 0.0, %v776
        %v778 = vpop.f32.mrf.mxu0
        %779 = vdwg.mxu0
        %v780 = vld [vmem:[%s4 + $0x5] sm:$0x1]
        %v781 = vld [vmem:[%s4 + $0x9] sm:$0x1]
        %v782 = vsel %vm317, %v777, 0.0
        %v783 = vrot.slane %v782, 4
        %v784 = vadd.f32 %v782, %v783
        %v785 = vrot.slane %v784, 2
        %v786 = vadd.f32 %v784, %v785
        %v787 = vrot.slane %v786, 1
        %v788 = vadd.f32 %v786, %v787
        %v789 = vmul.f32 %v777, %v777
        %v790 = vsel %vm317, %v789, 0.0
        %v791 = vrot.slane %v790, 4
        %v792 = vadd.f32 %v790, %v791
        %v793 = vrot.slane %v792, 2
        %v794 = vadd.f32 %v792, %v793
        %v795 = vrot.slane %v794, 1
        %v796 = vadd.f32 %v794, %v795
        %v797 = vmul.f32 %v788, 0.125
        %v798 = vmul.f32 %v796, 0.125
        %v799 = vmul.f32 %v797, %v797
        %v800 = vsub.f32 %v798, %v799
        %v801 = vadd.f32 %v800, 0.001
        %v802 = vrsqrt.pop %v801
        %v803 = vmul.f32 %v780, %v802
        %v804 = vmul.f32 %v797, %v803
        %v805 = vsub.f32 %v781, %v804
        %v806 = vlaneseq
        %v807 = vshrl.u32 %v806, 7
        %v808 = vsub.s32 0, %v807
        %v809 = vrot.slane %v803, %v808
        %v810 = vmul.f32 %v777, %v809
        %v811 = vlaneseq
        %v812 = vshrl.u32 %v811, 7
        %v813 = vsub.s32 0, %v812
        %v814 = vrot.slane %v805, %v813
        %v815 = vadd.f32 %v810, %v814
        %v816 = vmul.f32 %v815, 0.01
        %v817 = vmax.f32 %v815, %v816
        %v818 = vadd.f32 %v585, %v817
        %v819 = vld [vmem:[%s4 + $0xa] sm:$0x1]
        %v820 = vld [vmem:[%s3] sm:$0xff]
        %v821 = vld [vmem:[%s3 + $0x8] sm:$0xff]
        %v822 = vld [vmem:[%s3 + $0x10] sm:$0xff]
        %v823 = vld [vmem:[%s3 + $0x18] sm:$0xff]
        %v824 = vlaneseq
        %v825 = vshrl.u32 %v824, 7
        %v826 = vsub.s32 0, %v825
        %v827 = vrot.slane %v819, %v826
        %v829 = vsel %vm317, %v818, 0
        %831 = vmatprep.subr.mxu0 0.0
        %832 = vmatpush1.msra.mxu0 0.0
        %833 = vmatprep.subr.mxu0 0.0
        %834 = vmatpush1.msra.mxu0 0.0
        %835 = vmatprep.subr.mxu0 0.0
        %836 = vmatpush1.msra.mxu0 0.0
        %837 = vmatprep.subr.mxu0 0.0
        %838 = vmatpush1.msra.mxu0 0.0
        %839 = vmatprep.subr.mxu0 0.0
        %840 = vmatpush1.msra.mxu0 0.0
        %841 = vmatprep.subr.mxu0 0.0
        %842 = vmatpush1.msra.mxu0 0.0
        %843 = vmatprep.subr.mxu0 0.0
        %844 = vmatpush1.msra.mxu0 0.0
        %845 = vmatprep.subr.mxu0 0.0
        %846 = vmatpush1.msra.mxu0 0.0
        %847 = vmatprep.subr.mxu0 0.0
        %848 = vmatpush1.msra.mxu0 0.0
        %849 = vmatprep.subr.mxu0 0.0
        %850 = vmatpush1.msra.mxu0 0.0
        %851 = vmatprep.subr.mxu0 0.0
        %852 = vmatpush1.msra.mxu0 0.0
        %853 = vmatprep.subr.mxu0 0.0
        %854 = vmatpush1.msra.mxu0 0.0
        %855 = vmatprep.subr.mxu0 0.0
        %856 = vmatpush1.msra.mxu0 %v823
        %857 = vmatprep.subr.mxu0 0.0
        %858 = vmatpush1.msra.mxu0 %v822
        %859 = vmatprep.subr.mxu0 0.0
        %860 = vmatpush1.msra.mxu0 %v821
        %861 = vmatprep.subr.mxu0 0.0
        %862 = vmatpush1.msra.mxu0 %v820
        %863 = vmatprep.subr.mxu0 0.0
        %864 = vmatpush2.msra.mxu0 0.0
        %865 = vmatprep.subr.mxu0 0.0
        %866 = vmatpush2.msra.mxu0 0.0
        %867 = vmatprep.subr.mxu0 0.0
        %868 = vmatpush2.msra.mxu0 0.0
        %869 = vmatprep.subr.mxu0 0.0
        %870 = vmatpush2.msra.mxu0 0.0
        %871 = vmatprep.subr.mxu0 0.0
        %872 = vmatpush2.msra.mxu0 0.0
        %873 = vmatprep.subr.mxu0 0.0
        %874 = vmatpush2.msra.mxu0 0.0
        %875 = vmatprep.subr.mxu0 0.0
        %876 = vmatpush2.msra.mxu0 0.0
        %877 = vmatprep.subr.mxu0 0.0
        %878 = vmatpush2.msra.mxu0 0.0
        %879 = vmatprep.subr.mxu0 0.0
        %880 = vmatpush2.msra.mxu0 0.0
        %881 = vmatprep.subr.mxu0 0.0
        %882 = vmatpush2.msra.mxu0 0.0
        %883 = vmatprep.subr.mxu0 0.0
        %884 = vmatpush2.msra.mxu0 0.0
        %885 = vmatprep.subr.mxu0 0.0
        %886 = vmatpush2.msra.mxu0 0.0
        %887 = vmatprep.subr.mxu0 0.0
        %888 = vmatpush2.msra.mxu0 0.0
        %889 = vmatprep.subr.mxu0 0.0
        %890 = vmatpush2.msra.mxu0 0.0
        %891 = vmatprep.subr.mxu0 0.0
        %892 = vmatpush2.msra.mxu0 0.0
        %893 = vmatprep.subr.mxu0 0.0
        %894 = vmatpush2.msra.mxu0 0.0
        %895 = vmatprep.mubr.f32.mxu0 0.0
        %896 = vmatmul.mubr.f32.gmra.mxu0 %v829
        %v897 = vpop.f32.mrf.mxu0
        %v898 = vadd.f32 %v827, %v897
        %v899 = vpop.f32.mrf.mxu0
        %900 = vdwg.mxu0
        %901 = vst.msk [vmem:[%s230] sm:$0xff] %vm317, %v898
        %s902 = sand.u32 %s138, 1
        %s903 = scalar_lea.sflag [#allocation4], %s902
        %s904 = sand.u32 %s138, 1
        %s905 = smul.addr %s904, 8
        %s906 = scalar_lea.vmem [#allocation5], %s905
        // Predicated region
        $region45: #{tpu_custom_call.1} parent=39 // pred_check
          %p907 = pneg %p148
        $region46: #{tpu_custom_call.1} parent=39 // pred_check_branch
          %909 = sbr.rel (%p907) target = $region48
        $region47: #{tpu_custom_call.1} parent=39 // pred_region
          %s911 = ssub.s32 128, 128
          %912 = vsyncadd %s903, %s911
          %s913 = smul.addr %s20, 128
          %s914 = scalar_lea.hbm %s5, %s913
          %s916 = sshll.u32 %s906, 4
          %s917 = int_to_ptr.vmem [resolvable:$true] %s916
          %919 = dma.vmem_to_hbm [thread:$0]  %s917, 128, %s914, %s903
        $region48: #{tpu_custom_call.1} parent=39 // pred_fallthru
          _
      $region40: #{tpu_custom_call.1} parent=5 // pred_fallthru
        _
      %p920 = scmp.le.s32.totalorder 2, %s15
      // Predicated region
      $region49: #{tpu_custom_call.1} parent=5 // pred_check
        %p921 = pneg %p920
      $region50: #{tpu_custom_call.1} parent=5 // pred_check_branch
        %923 = sbr.rel (%p921) target = $region52
      $region51: #{tpu_custom_call.1} parent=5 // pred_region
        %s924 = ssub.s32 %s15, 2
        // Predicated region
        $region53: #{tpu_custom_call.1} parent=51 // pred_check
          %p925 = pneg %p154
        $region54: #{tpu_custom_call.1} parent=51 // pred_check_branch
          %927 = sbr.rel (%p925) target = $region56
        $region55: #{tpu_custom_call.1} parent=51 // pred_region
          %s928 = sand.u32 %s139, 1
          %s929 = scalar_lea.sflag [#allocation4], %s928
          %s930 = sand.u32 %s139, 1
          %s931 = smul.addr %s930, 8
          %s932 = scalar_lea.vmem [#allocation5], %s931
          %933 = dma.done %s929, 128
        $region56: #{tpu_custom_call.1} parent=51 // pred_fallthru
          _
      $region52: #{tpu_custom_call.1} parent=5 // pred_fallthru
        _
    $region6: #{tpu_custom_call.1} parent=1 // loop_footer
      %s19 = sadd.s32 1, %s15
    $region7: #{tpu_custom_call.1} parent=1 // loop_footer_branch
      %14 = sbr.rel target = $region3
    $region8: #{tpu_custom_call.1} parent=1 // loop_exit
      _
    %934 = vsyncpa [#allocation3], 1
    %s935 = scalar_lea.sflag [#allocation3], 1
    %936 = vsyncpa %s935, 1
    %937 = vsyncpa [#allocation4], 1
    %s938 = scalar_lea.sflag [#allocation4], 1
    %939 = vsyncpa %s938, 1

</llo_original>
